<compile_context>
chip_gen: v6e
topology: v6e:2x2x1
jax: 0.10.0
libtpu: 0.0.40
codegen_flags: <defaults>
</compile_context>

<pallas_src>
import math

import jax
import jax.numpy as jnp
from jax.experimental import pallas as pl
from jax.experimental.pallas import tpu as pltpu


def _mlp_kernel(x_ref, w1_ref, b1_ref, w2_ref, b2_ref, wf_ref, bf_ref, o_ref):
    s0 = x_ref[...]                                   # (TM, C) f32 from HBM
    w_dtype = w1_ref.dtype
    x_c = s0.astype(w_dtype)                          # in-kernel cast (no-op for f32)

    # linear_1 + ReLU (MXU, f32 accumulation; biases stay f32)
    h = jnp.dot(x_c, w1_ref[...], preferred_element_type=jnp.float32) + b1_ref[...]
    h = jnp.maximum(h, 0.0)

    # linear_2
    h2 = jnp.dot(h.astype(w_dtype), w2_ref[...],
                 preferred_element_type=jnp.float32) + b2_ref[...]

    # residual in true f32 (from the f32 load, not the cast operand)
    s = h2 + s0.astype(jnp.float32)

    # linear_final — true output width (nres), no lane padding
    out = jnp.dot(s.astype(w_dtype), wf_ref[...],
                  preferred_element_type=jnp.float32) + bf_ref[...]
    o_ref[...] = out.astype(o_ref.dtype)


def sequence_mlp_pallas(s, params, *, tm=2048, compute_dtype=jnp.float32):
    """s: (..., c) float32.  params: dict with pre-transposed (in, out) weights.

    compute_dtype=jnp.bfloat16 selects the reduced-precision MXU path for the
    matmul operands only; the activation read, biases, accumulation and the
    residual add all stay f32.  Default f32 is the right choice on v5e and is
    fine everywhere (the kernel is bandwidth/overhead-bound at c=32).
    """
    w1_t, b1 = params["w1_t"], params["b1"]           # (c, c), (1, c)
    w2_t, b2 = params["w2_t"], params["b2"]           # (c, c), (1, c)
    wf_t, bf = params["wf_t"], params["bf"]           # (c, nres), (1, nres)

    c = s.shape[-1]
    nres = wf_t.shape[-1]
    lead_shape = s.shape[:-1]

    x = s.reshape(-1, c)                              # stays f32 in HBM
    n = x.shape[0]

    # Optional reduced-precision MXU path: cast the (tiny) weights only; the
    # activation cast happens inside the kernel at the dot operands.
    if jnp.dtype(compute_dtype) != jnp.dtype(jnp.float32):
        w1_t = w1_t.astype(compute_dtype)
        w2_t = w2_t.astype(compute_dtype)
        wf_t = wf_t.astype(compute_dtype)

    # Row-tile clamp: multiples of 256 for large inputs (MXU M dim / packed
    # vregs), 16-row granularity for tiny inputs.  No jnp.pad of x: Pallas
    # masks the partial last block.
    # TODO(synk): on v7x, if n is huge consider capping tm so the grid keeps
    # >=4 steps for the 2-TensorCore "parallel" sharding.
    if n <= 256:
        tm = pl.cdiv(max(n, 1), 16) * 16
    else:
        tm = min(tm, pl.cdiv(n, 256) * 256)
    grid = (pl.cdiv(n, tm),)

    # Weights/biases are ~tens of KiB: keep them fully resident in VMEM.
    weight_spec = pl.BlockSpec(memory_space=pltpu.MemorySpace.VMEM)

    w_itemsize = jnp.dtype(w1_t.dtype).itemsize
    weight_bytes = ((w1_t.size + w2_t.size + wf_t.size) * w_itemsize
                    + (b1.size + b2.size + bf.size) * 4)
    cost = pl.CostEstimate(
        flops=2 * n * c * (2 * c + nres),
        transcendentals=0,
        bytes_accessed=n * c * 4 + n * nres * 4 + weight_bytes,
    )

    out = pl.pallas_call(
        _mlp_kernel,
        out_shape=jax.ShapeDtypeStruct((n, nres), s.dtype),
        grid_spec=pltpu.PrefetchScalarGridSpec(
            num_scalar_prefetch=0,
            grid=grid,
            in_specs=[
                pl.BlockSpec((tm, c), lambda i: (i, 0)),   # streamed activation rows
                weight_spec, weight_spec,                  # W1^T, b1
                weight_spec, weight_spec,                  # W2^T, b2
                weight_spec, weight_spec,                  # Wf^T, bf
            ],
            # Last block dim == full array dim (nres), so the (8,128) rule is
            # satisfied without lane padding; partial-row stores are masked.
            out_specs=pl.BlockSpec((tm, nres), lambda i: (i, 0)),
        ),
        compiler_params=pltpu.CompilerParams(
            dimension_semantics=("parallel",)),
        cost_estimate=cost,
    )(x, w1_t, b1, w2_t, b2, wf_t, bf)

    return out.reshape(*lead_shape, nres)


def init_params(key, c, num_residue_types):
    """Deterministic synthetic init mirroring the module's init styles.

    linear_1 / linear_2: He ("relu") truncated-normal, bias=0.
    linear_final: LeCun ("default") truncated-normal, bias=0.
    Weights are stored transposed as (in_dim, out_dim).
    """
    k1, k2, k3 = jax.random.split(key, 3)

    def trunc_init(k, fan_in, shape, scale):
        std_trunc = 0.87962566103423978  # std of standard truncnorm on [-2, 2]
        std = math.sqrt(scale / max(1, fan_in)) / std_trunc
        return std * jax.random.truncated_normal(k, -2.0, 2.0, shape, jnp.float32)

    w1_t = trunc_init(k1, c, (c, c), scale=2.0)                   # He ('relu')
    w2_t = trunc_init(k2, c, (c, c), scale=2.0)                   # He ('relu')
    wf_t = trunc_init(k3, c, (c, num_residue_types), scale=1.0)   # LeCun ('default')
    return {
        "w1_t": w1_t, "b1": jnp.zeros((1, c), jnp.float32),
        "w2_t": w2_t, "b2": jnp.zeros((1, c), jnp.float32),
        "wf_t": wf_t, "bf": jnp.zeros((1, num_residue_types), jnp.float32),
    }


def sequence_mlp_ref(s, params):
    h = jnp.maximum(s @ params["w1_t"] + params["b1"][0], 0.0)
    h = h @ params["w2_t"] + params["b2"][0]
    s2 = h + s
    return s2 @ params["wf_t"] + params["bf"][0]


if __name__ == "__main__":
    key = jax.random.PRNGKey(0)
    batch, seq, c, num_residue_types = 2, 8, 32, 21

    k_in, k_par = jax.random.split(key)
    s = jax.random.normal(k_in, (batch, seq, c), jnp.float32)
    params = init_params(k_par, c, num_residue_types)

    ref = sequence_mlp_ref(s, params)

    # Default f32 path (safe on v5e/v6e/v7x).
    out = jax.block_until_ready(sequence_mlp_pallas(s, params))
    assert out.shape == (batch, seq, num_residue_types), out.shape
    assert jnp.allclose(out, ref, atol=1e-4, rtol=1e-4), \
        float(jnp.max(jnp.abs(out - ref)))

    # Optional bf16 operand path (v6e / v7x): f32 read/accum/residual,
    # in-kernel cast at the dot operands only; relaxed tolerance.
    out_bf16 = jax.block_until_ready(
        sequence_mlp_pallas(s, params, compute_dtype=jnp.bfloat16))
    assert out_bf16.shape == (batch, seq, num_residue_types), out_bf16.shape
    assert jnp.allclose(out_bf16, ref, atol=1e-1, rtol=1e-1), \
        float(jnp.max(jnp.abs(out_bf16 - ref)))

    print("KERNEL_OK")
</pallas_src>

<mosaic_0001>
module attributes {stable_mosaic.version = 11 : i64} {
  func.func @_mlp_kernel(%arg0: i32, %arg1: memref<16x32xf32, #tpu.memory_space<vmem>>, %arg2: memref<32x32xf32, #tpu.memory_space<vmem>>, %arg3: memref<1x32xf32, #tpu.memory_space<vmem>>, %arg4: memref<32x32xf32, #tpu.memory_space<vmem>>, %arg5: memref<1x32xf32, #tpu.memory_space<vmem>>, %arg6: memref<32x21xf32, #tpu.memory_space<vmem>>, %arg7: memref<1x21xf32, #tpu.memory_space<vmem>>, %arg8: memref<16x21xf32, #tpu.memory_space<vmem>>) attributes {dimension_semantics = [#tpu.dimension_semantics<parallel>], iteration_bounds = array<i64: 1>, scalar_prefetch = 0 : i64, scratch_operands = 0 : i64, tpu.core_type = #tpu.core_type<tc>, window_params = [{transform_indices = @transform_0, window_bounds = array<i64: 16, 32>}, {pipeline_mode = #tpu.pipeline_mode<synchronous>, transform_indices = @transform_1, window_bounds = array<i64: 32, 32>}, {pipeline_mode = #tpu.pipeline_mode<synchronous>, transform_indices = @transform_2, window_bounds = array<i64: 1, 32>}, {pipeline_mode = #tpu.pipeline_mode<synchronous>, transform_indices = @transform_3, window_bounds = array<i64: 32, 32>}, {pipeline_mode = #tpu.pipeline_mode<synchronous>, transform_indices = @transform_4, window_bounds = array<i64: 1, 32>}, {pipeline_mode = #tpu.pipeline_mode<synchronous>, transform_indices = @transform_5, window_bounds = array<i64: 32, 21>}, {pipeline_mode = #tpu.pipeline_mode<synchronous>, transform_indices = @transform_6, window_bounds = array<i64: 1, 21>}, {transform_indices = @transform_7, window_bounds = array<i64: 16, 21>}]} {
    %c0 = arith.constant 0 : index
    %c0_0 = arith.constant 0 : index
    %0 = vector.load %arg1[%c0, %c0_0] : memref<16x32xf32, #tpu.memory_space<vmem>>, vector<16x32xf32>
    %c0_1 = arith.constant 0 : index
    %c0_2 = arith.constant 0 : index
    %1 = vector.load %arg2[%c0_1, %c0_2] : memref<32x32xf32, #tpu.memory_space<vmem>>, vector<32x32xf32>
    %cst = arith.constant dense<0.000000e+00> : vector<16x32xf32>
    %2 = tpu.matmul %0, %1, %cst {dimension_numbers = #tpu.dot_dimension_numbers<[1], [0], [0], [1], [0, 0, 1, 1], [], []>} : vector<16x32xf32>, vector<32x32xf32>, vector<16x32xf32> -> vector<16x32xf32>
    %c0_3 = arith.constant 0 : index
    %c0_4 = arith.constant 0 : index
    %3 = vector.load %arg3[%c0_3, %c0_4] : memref<1x32xf32, #tpu.memory_space<vmem>>, vector<1x32xf32>
    %4 = vector.broadcast %3 : vector<1x32xf32> to vector<16x32xf32>
    %5 = arith.addf %2, %4 : vector<16x32xf32>
    %cst_5 = arith.constant 0.000000e+00 : f32
    %6 = vector.broadcast %cst_5 : f32 to vector<16x32xf32>
    %7 = arith.maximumf %5, %6 : vector<16x32xf32>
    %c0_6 = arith.constant 0 : index
    %c0_7 = arith.constant 0 : index
    %8 = vector.load %arg4[%c0_6, %c0_7] : memref<32x32xf32, #tpu.memory_space<vmem>>, vector<32x32xf32>
    %cst_8 = arith.constant dense<0.000000e+00> : vector<16x32xf32>
    %9 = tpu.matmul %7, %8, %cst_8 {dimension_numbers = #tpu.dot_dimension_numbers<[1], [0], [0], [1], [0, 0, 1, 1], [], []>} : vector<16x32xf32>, vector<32x32xf32>, vector<16x32xf32> -> vector<16x32xf32>
    %c0_9 = arith.constant 0 : index
    %c0_10 = arith.constant 0 : index
    %10 = vector.load %arg5[%c0_9, %c0_10] : memref<1x32xf32, #tpu.memory_space<vmem>>, vector<1x32xf32>
    %11 = vector.broadcast %10 : vector<1x32xf32> to vector<16x32xf32>
    %12 = arith.addf %9, %11 : vector<16x32xf32>
    %13 = arith.addf %12, %0 : vector<16x32xf32>
    %c0_11 = arith.constant 0 : index
    %c0_12 = arith.constant 0 : index
    %14 = vector.load %arg6[%c0_11, %c0_12] : memref<32x21xf32, #tpu.memory_space<vmem>>, vector<32x21xf32>
    %cst_13 = arith.constant dense<0.000000e+00> : vector<16x21xf32>
    %15 = tpu.matmul %13, %14, %cst_13 {dimension_numbers = #tpu.dot_dimension_numbers<[1], [0], [0], [1], [0, 0, 1, 1], [], []>} : vector<16x32xf32>, vector<32x21xf32>, vector<16x21xf32> -> vector<16x21xf32>
    %c0_14 = arith.constant 0 : index
    %c0_15 = arith.constant 0 : index
    %16 = vector.load %arg7[%c0_14, %c0_15] : memref<1x21xf32, #tpu.memory_space<vmem>>, vector<1x21xf32>
    %17 = vector.broadcast %16 : vector<1x21xf32> to vector<16x21xf32>
    %18 = arith.addf %15, %17 : vector<16x21xf32>
    %c0_16 = arith.constant 0 : index
    %c0_17 = arith.constant 0 : index
    %19 = vector.load %arg8[%c0_16, %c0_17] : memref<16x21xf32, #tpu.memory_space<vmem>>, vector<16x21xf32>
    tpu.vector_store %arg8[%c0_16, %c0_17], %18 {strides = array<i32>} : memref<16x21xf32, #tpu.memory_space<vmem>>, vector<16x21xf32>,
    return
  }
  func.func @transform_0(%arg0: i32) -> (i32, i32) {
    %c0_i32 = arith.constant 0 : i32
    %c0_i32_0 = arith.constant 0 : i32
    return %arg0, %c0_i32 : i32, i32
  }
  func.func @transform_1(%arg0: i32) -> (i32, i32) {
    %c0_i32 = arith.constant 0 : i32
    %c0_i32_0 = arith.constant 0 : i32
    %c0_i32_1 = arith.constant 0 : i32
    return %c0_i32, %c0_i32_0 : i32, i32
  }
  func.func @transform_2(%arg0: i32) -> (i32, i32) {
    %c0_i32 = arith.constant 0 : i32
    %c0_i32_0 = arith.constant 0 : i32
    %c0_i32_1 = arith.constant 0 : i32
    return %c0_i32, %c0_i32_0 : i32, i32
  }
  func.func @transform_3(%arg0: i32) -> (i32, i32) {
    %c0_i32 = arith.constant 0 : i32
    %c0_i32_0 = arith.constant 0 : i32
    %c0_i32_1 = arith.constant 0 : i32
    return %c0_i32, %c0_i32_0 : i32, i32
  }
  func.func @transform_4(%arg0: i32) -> (i32, i32) {
    %c0_i32 = arith.constant 0 : i32
    %c0_i32_0 = arith.constant 0 : i32
    %c0_i32_1 = arith.constant 0 : i32
    return %c0_i32, %c0_i32_0 : i32, i32
  }
  func.func @transform_5(%arg0: i32) -> (i32, i32) {
    %c0_i32 = arith.constant 0 : i32
    %c0_i32_0 = arith.constant 0 : i32
    %c0_i32_1 = arith.constant 0 : i32
    return %c0_i32, %c0_i32_0 : i32, i32
  }
  func.func @transform_6(%arg0: i32) -> (i32, i32) {
    %c0_i32 = arith.constant 0 : i32
    %c0_i32_0 = arith.constant 0 : i32
    %c0_i32_1 = arith.constant 0 : i32
    return %c0_i32, %c0_i32_0 : i32, i32
  }
  func.func @transform_7(%arg0: i32) -> (i32, i32) {
    %c0_i32 = arith.constant 0 : i32
    %c0_i32_0 = arith.constant 0 : i32
    return %arg0, %c0_i32 : i32, i32
  }
}

</mosaic_0001>

<llo_original>
// kernel: tpu_custom_call.1
$region0: #{tpu_custom_call.1}
  #allocation0 [shape = 'u32[]', space=smem, size = 0x4, offset = 0x4, fixed_abs, tag = 'smem constant byte address 0x4 - core index']
  #allocation1 [shape = 'u32[144,128]{1,0:T(1,128)}', space=vmem, size = 0x12000, scoped, tag = 'internal scratch']
  %s0 = inlined_call_operand.vmem [shape: f32[16,32], index: 0, kind: input, shape index: {}]
  %s1 = inlined_call_operand.vmem [shape: f32[32,32], index: 1, kind: input, shape index: {}]
  %s2 = inlined_call_operand.vmem [shape: f32[1,32], index: 2, kind: input, shape index: {}]
  %s3 = inlined_call_operand.hbm [shape: f32[32,32], index: 3, kind: input, shape index: {}]
  %s4 = inlined_call_operand.vmem [shape: f32[1,32], index: 4, kind: input, shape index: {}]
  %s5 = inlined_call_operand.vmem [shape: f32[32,21], index: 5, kind: input, shape index: {}]
  %s6 = inlined_call_operand.vmem [shape: f32[1,21], index: 6, kind: input, shape index: {}]
  %s7 = inlined_call_operand.hbm [shape: f32[16,21], index: 7, kind: output, shape index: {}]
  %s8 = sld [smem:[#allocation0]]
  $region42: #{tpu_custom_call.1} parent=0
    _
  %s10 = ssub.s32 1, %s8
  %s11 = scalar_select 0, %s10, %s8
  $region1: #{tpu_custom_call.1} parent=0
    #allocation2 [shape = 'u8[16384]{0}', space=vmem, size = 0x4000, scoped, tag = 'input window, operand 3, single buffered']
    #allocation3 [shape = 's32[1]{0}', space=sflag, size = 0x4, scoped, tag = 'scoped memory for tpu_custom_call.1']
    #allocation4 [shape = 's32[1]{0}', space=sflag, size = 0x4, scoped, tag = 'scoped memory for tpu_custom_call.1']
    #allocation5 [shape = 'u8[8192]{0}', space=vmem, size = 0x2000, scoped, tag = 'output window, operand 0, single buffered']
    %12 = vsyncpa [#allocation3], 0
    %13 = vsyncpa [#allocation4], 0
    // Predicated region
    $region2: #{tpu_custom_call.1} parent=1 // pred_check
      _
    $region3: #{tpu_custom_call.1} parent=1 // pred_check_branch
      %15 = sbr.rel (0) target = $region5
    $region4: #{tpu_custom_call.1} parent=1 // pred_region
      _
    $region5: #{tpu_custom_call.1} parent=1 // pred_fallthru
      _
    // Predicated region
    $region6: #{tpu_custom_call.1} parent=1 // pred_check
      _
    $region7: #{tpu_custom_call.1} parent=1 // pred_check_branch
      %17 = sbr.rel (0) target = $region9
    $region8: #{tpu_custom_call.1} parent=1 // pred_region
      _
    $region9: #{tpu_custom_call.1} parent=1 // pred_fallthru
      _
    // Predicated region
    $region10: #{tpu_custom_call.1} parent=1 // pred_check
      _
    $region11: #{tpu_custom_call.1} parent=1 // pred_check_branch
      %19 = sbr.rel (0) target = $region13
    $region12: #{tpu_custom_call.1} parent=1 // pred_region
      _
    $region13: #{tpu_custom_call.1} parent=1 // pred_fallthru
      _
    // Predicated region
    $region14: #{tpu_custom_call.1} parent=1 // pred_check
      _
    $region15: #{tpu_custom_call.1} parent=1 // pred_check_branch
      %21 = sbr.rel (0) target = $region17
    $region16: #{tpu_custom_call.1} parent=1 // pred_region
      %s23 = ssub.s32 512, 512
      %24 = vsyncadd [#allocation3], %s23
      %s25 = sshll.u32 [#allocation2], 4
      %s26 = int_to_ptr.vmem [resolvable:$true] %s25
      %31 = dma.hbm_to_vmem [thread:$0]  %s3, 512, %s26, [#allocation3], 128, 128, 8
    $region17: #{tpu_custom_call.1} parent=1 // pred_fallthru
      _
    // Predicated region
    $region18: #{tpu_custom_call.1} parent=1 // pred_check
      _
    $region19: #{tpu_custom_call.1} parent=1 // pred_check_branch
      %33 = sbr.rel (0) target = $region21
    $region20: #{tpu_custom_call.1} parent=1 // pred_region
      _
    $region21: #{tpu_custom_call.1} parent=1 // pred_fallthru
      _
    // Predicated region
    $region22: #{tpu_custom_call.1} parent=1 // pred_check
      _
    $region23: #{tpu_custom_call.1} parent=1 // pred_check_branch
      %35 = sbr.rel (0) target = $region25
    $region24: #{tpu_custom_call.1} parent=1 // pred_region
      _
    $region25: #{tpu_custom_call.1} parent=1 // pred_fallthru
      _
    // Predicated region
    $region26: #{tpu_custom_call.1} parent=1 // pred_check
      _
    $region27: #{tpu_custom_call.1} parent=1 // pred_check_branch
      %37 = sbr.rel (0) target = $region29
    $region28: #{tpu_custom_call.1} parent=1 // pred_region
      _
    $region29: #{tpu_custom_call.1} parent=1 // pred_fallthru
      _
    // Predicated region
    $region30: #{tpu_custom_call.1} parent=1 // pred_check
      _
    $region31: #{tpu_custom_call.1} parent=1 // pred_check_branch
      %39 = sbr.rel (0) target = $region33
    $region32: #{tpu_custom_call.1} parent=1 // pred_region
      %40 = dma.done [#allocation3], 512
    $region33: #{tpu_custom_call.1} parent=1 // pred_fallthru
      _
    %v41 = vld [vmem:[%s0] sm:$0xff]
    %v42 = vld [vmem:[%s0 + $0x8] sm:$0xff]
    %v43 = vld [vmem:[%s1] sm:$0xff]
    %v44 = vld [vmem:[%s1 + $0x8] sm:$0xff]
    %v45 = vld [vmem:[%s1 + $0x10] sm:$0xff]
    %v46 = vld [vmem:[%s1 + $0x18] sm:$0xff]
    %v47 = vld [vmem:[%s2] sm:$0x1]
    %v49 = vlaneseq
    %v50 = vshrl.u32 %v49, 7
    %v51 = vsub.s32 0, %v50
    %v52 = vrot.slane %v47, %v51
    %vm54 = vcmask 261120
    %v56 = vsel %vm54, %v41, 0
    %v59 = vsel %vm54, %v42, 0
    %61 = vmatprep.subr.mxu0 0.0
    %62 = vmatpush1.msra.mxu0 0.0
    %63 = vmatprep.subr.mxu0 0.0
    %64 = vmatpush1.msra.mxu0 0.0
    %65 = vmatprep.subr.mxu0 0.0
    %66 = vmatpush1.msra.mxu0 0.0
    %67 = vmatprep.subr.mxu0 0.0
    %68 = vmatpush1.msra.mxu0 0.0
    %69 = vmatprep.subr.mxu0 0.0
    %70 = vmatpush1.msra.mxu0 0.0
    %71 = vmatprep.subr.mxu0 0.0
    %72 = vmatpush1.msra.mxu0 0.0
    %73 = vmatprep.subr.mxu0 0.0
    %74 = vmatpush1.msra.mxu0 0.0
    %75 = vmatprep.subr.mxu0 0.0
    %76 = vmatpush1.msra.mxu0 0.0
    %77 = vmatprep.subr.mxu0 0.0
    %78 = vmatpush1.msra.mxu0 0.0
    %79 = vmatprep.subr.mxu0 0.0
    %80 = vmatpush1.msra.mxu0 0.0
    %81 = vmatprep.subr.mxu0 0.0
    %82 = vmatpush1.msra.mxu0 0.0
    %83 = vmatprep.subr.mxu0 0.0
    %84 = vmatpush1.msra.mxu0 0.0
    %85 = vmatprep.subr.mxu0 0.0
    %86 = vmatpush1.msra.mxu0 %v46
    %87 = vmatprep.subr.mxu0 0.0
    %88 = vmatpush1.msra.mxu0 %v45
    %89 = vmatprep.subr.mxu0 0.0
    %90 = vmatpush1.msra.mxu0 %v44
    %91 = vmatprep.subr.mxu0 0.0
    %92 = vmatpush1.msra.mxu0 %v43
    %93 = vmatprep.subr.mxu0 0.0
    %94 = vmatpush2.msra.mxu0 0.0
    %95 = vmatprep.subr.mxu0 0.0
    %96 = vmatpush2.msra.mxu0 0.0
    %97 = vmatprep.subr.mxu0 0.0
    %98 = vmatpush2.msra.mxu0 0.0
    %99 = vmatprep.subr.mxu0 0.0
    %100 = vmatpush2.msra.mxu0 0.0
    %101 = vmatprep.subr.mxu0 0.0
    %102 = vmatpush2.msra.mxu0 0.0
    %103 = vmatprep.subr.mxu0 0.0
    %104 = vmatpush2.msra.mxu0 0.0
    %105 = vmatprep.subr.mxu0 0.0
    %106 = vmatpush2.msra.mxu0 0.0
    %107 = vmatprep.subr.mxu0 0.0
    %108 = vmatpush2.msra.mxu0 0.0
    %109 = vmatprep.subr.mxu0 0.0
    %110 = vmatpush2.msra.mxu0 0.0
    %111 = vmatprep.subr.mxu0 0.0
    %112 = vmatpush2.msra.mxu0 0.0
    %113 = vmatprep.subr.mxu0 0.0
    %114 = vmatpush2.msra.mxu0 0.0
    %115 = vmatprep.subr.mxu0 0.0
    %116 = vmatpush2.msra.mxu0 0.0
    %117 = vmatprep.subr.mxu0 0.0
    %118 = vmatpush2.msra.mxu0 0.0
    %119 = vmatprep.subr.mxu0 0.0
    %120 = vmatpush2.msra.mxu0 0.0
    %121 = vmatprep.subr.mxu0 0.0
    %122 = vmatpush2.msra.mxu0 0.0
    %123 = vmatprep.subr.mxu0 0.0
    %124 = vmatpush2.msra.mxu0 0.0
    %125 = vmatprep.mubr.f32.mxu0 0.0
    %126 = vmatmul.mubr.f32.gmra.mxu0 %v56
    %v127 = vpop.f32.mrf.mxu0
    %v128 = vadd.f32 %v52, %v127
    %v129 = vpop.f32.mrf.mxu0
    %130 = vmatprep.mubr.f32.mxu0 0.0
    %131 = vmatmul.mubr.f32.gmra.mxu0 %v59
    %v132 = vpop.f32.mrf.mxu0
    %v133 = vadd.f32 %v52, %v132
    %v134 = vpop.f32.mrf.mxu0
    %135 = vdwg.mxu0
    %v136 = vmax.f32 %v128, 0.0
    %v137 = vmax.f32 %v133, 0.0
    %v138 = vld [vmem:[#allocation2] sm:$0xff]
    %v139 = vld [vmem:[#allocation2 + $0x8] sm:$0xff]
    %v140 = vld [vmem:[#allocation2 + $0x10] sm:$0xff]
    %v141 = vld [vmem:[#allocation2 + $0x18] sm:$0xff]
    %v142 = vld [vmem:[%s4] sm:$0x1]
    %v144 = vlaneseq
    %v145 = vshrl.u32 %v144, 7
    %v146 = vsub.s32 0, %v145
    %v147 = vrot.slane %v142, %v146
    %v150 = vsel %vm54, %v136, 0
    %v153 = vsel %vm54, %v137, 0
    %155 = vmatprep.subr.mxu0 0.0
    %156 = vmatpush1.msra.mxu0 0.0
    %157 = vmatprep.subr.mxu0 0.0
    %158 = vmatpush1.msra.mxu0 0.0
    %159 = vmatprep.subr.mxu0 0.0
    %160 = vmatpush1.msra.mxu0 0.0
    %161 = vmatprep.subr.mxu0 0.0
    %162 = vmatpush1.msra.mxu0 0.0
    %163 = vmatprep.subr.mxu0 0.0
    %164 = vmatpush1.msra.mxu0 0.0
    %165 = vmatprep.subr.mxu0 0.0
    %166 = vmatpush1.msra.mxu0 0.0
    %167 = vmatprep.subr.mxu0 0.0
    %168 = vmatpush1.msra.mxu0 0.0
    %169 = vmatprep.subr.mxu0 0.0
    %170 = vmatpush1.msra.mxu0 0.0
    %171 = vmatprep.subr.mxu0 0.0
    %172 = vmatpush1.msra.mxu0 0.0
    %173 = vmatprep.subr.mxu0 0.0
    %174 = vmatpush1.msra.mxu0 0.0
    %175 = vmatprep.subr.mxu0 0.0
    %176 = vmatpush1.msra.mxu0 0.0
    %177 = vmatprep.subr.mxu0 0.0
    %178 = vmatpush1.msra.mxu0 0.0
    %179 = vmatprep.subr.mxu0 0.0
    %180 = vmatpush1.msra.mxu0 %v141
    %181 = vmatprep.subr.mxu0 0.0
    %182 = vmatpush1.msra.mxu0 %v140
    %183 = vmatprep.subr.mxu0 0.0
    %184 = vmatpush1.msra.mxu0 %v139
    %185 = vmatprep.subr.mxu0 0.0
    %186 = vmatpush1.msra.mxu0 %v138
    %187 = vmatprep.subr.mxu0 0.0
    %188 = vmatpush2.msra.mxu0 0.0
    %189 = vmatprep.subr.mxu0 0.0
    %190 = vmatpush2.msra.mxu0 0.0
    %191 = vmatprep.subr.mxu0 0.0
    %192 = vmatpush2.msra.mxu0 0.0
    %193 = vmatprep.subr.mxu0 0.0
    %194 = vmatpush2.msra.mxu0 0.0
    %195 = vmatprep.subr.mxu0 0.0
    %196 = vmatpush2.msra.mxu0 0.0
    %197 = vmatprep.subr.mxu0 0.0
    %198 = vmatpush2.msra.mxu0 0.0
    %199 = vmatprep.subr.mxu0 0.0
    %200 = vmatpush2.msra.mxu0 0.0
    %201 = vmatprep.subr.mxu0 0.0
    %202 = vmatpush2.msra.mxu0 0.0
    %203 = vmatprep.subr.mxu0 0.0
    %204 = vmatpush2.msra.mxu0 0.0
    %205 = vmatprep.subr.mxu0 0.0
    %206 = vmatpush2.msra.mxu0 0.0
    %207 = vmatprep.subr.mxu0 0.0
    %208 = vmatpush2.msra.mxu0 0.0
    %209 = vmatprep.subr.mxu0 0.0
    %210 = vmatpush2.msra.mxu0 0.0
    %211 = vmatprep.subr.mxu0 0.0
    %212 = vmatpush2.msra.mxu0 0.0
    %213 = vmatprep.subr.mxu0 0.0
    %214 = vmatpush2.msra.mxu0 0.0
    %215 = vmatprep.subr.mxu0 0.0
    %216 = vmatpush2.msra.mxu0 0.0
    %217 = vmatprep.subr.mxu0 0.0
    %218 = vmatpush2.msra.mxu0 0.0
    %219 = vmatprep.mubr.f32.mxu0 0.0
    %220 = vmatmul.mubr.f32.gmra.mxu0 %v150
    %v221 = vpop.f32.mrf.mxu0
    %v222 = vadd.f32 %v147, %v221
    %v223 = vpop.f32.mrf.mxu0
    %224 = vmatprep.mubr.f32.mxu0 0.0
    %225 = vmatmul.mubr.f32.gmra.mxu0 %v153
    %v226 = vpop.f32.mrf.mxu0
    %v227 = vadd.f32 %v147, %v226
    %v228 = vpop.f32.mrf.mxu0
    %229 = vdwg.mxu0
    %v230 = vadd.f32 %v222, %v41
    %v231 = vadd.f32 %v227, %v42
    %v232 = vld [vmem:[%s5] sm:$0xff]
    %v233 = vld [vmem:[%s5 + $0x8] sm:$0xff]
    %v234 = vld [vmem:[%s5 + $0x10] sm:$0xff]
    %v235 = vld [vmem:[%s5 + $0x18] sm:$0xff]
    %v236 = vld [vmem:[%s6] sm:$0x1]
    %v238 = vlaneseq
    %v239 = vshrl.u32 %v238, 7
    %v240 = vsub.s32 0, %v239
    %v241 = vrot.slane %v236, %v240
    %v244 = vsel %vm54, %v230, 0
    %v247 = vsel %vm54, %v231, 0
    %249 = vmatprep.subr.mxu0 0.0
    %250 = vmatpush1.msra.mxu0 0.0
    %251 = vmatprep.subr.mxu0 0.0
    %252 = vmatpush1.msra.mxu0 0.0
    %253 = vmatprep.subr.mxu0 0.0
    %254 = vmatpush1.msra.mxu0 0.0
    %255 = vmatprep.subr.mxu0 0.0
    %256 = vmatpush1.msra.mxu0 0.0
    %257 = vmatprep.subr.mxu0 0.0
    %258 = vmatpush1.msra.mxu0 0.0
    %259 = vmatprep.subr.mxu0 0.0
    %260 = vmatpush1.msra.mxu0 0.0
    %261 = vmatprep.subr.mxu0 0.0
    %262 = vmatpush1.msra.mxu0 0.0
    %263 = vmatprep.subr.mxu0 0.0
    %264 = vmatpush1.msra.mxu0 0.0
    %265 = vmatprep.subr.mxu0 0.0
    %266 = vmatpush1.msra.mxu0 0.0
    %267 = vmatprep.subr.mxu0 0.0
    %268 = vmatpush1.msra.mxu0 0.0
    %269 = vmatprep.subr.mxu0 0.0
    %270 = vmatpush1.msra.mxu0 0.0
    %271 = vmatprep.subr.mxu0 0.0
    %272 = vmatpush1.msra.mxu0 0.0
    %273 = vmatprep.subr.mxu0 0.0
    %274 = vmatpush1.msra.mxu0 %v235
    %275 = vmatprep.subr.mxu0 0.0
    %276 = vmatpush1.msra.mxu0 %v234
    %277 = vmatprep.subr.mxu0 0.0
    %278 = vmatpush1.msra.mxu0 %v233
    %279 = vmatprep.subr.mxu0 0.0
    %280 = vmatpush1.msra.mxu0 %v232
    %281 = vmatprep.subr.mxu0 0.0
    %282 = vmatpush2.msra.mxu0 0.0
    %283 = vmatprep.subr.mxu0 0.0
    %284 = vmatpush2.msra.mxu0 0.0
    %285 = vmatprep.subr.mxu0 0.0
    %286 = vmatpush2.msra.mxu0 0.0
    %287 = vmatprep.subr.mxu0 0.0
    %288 = vmatpush2.msra.mxu0 0.0
    %289 = vmatprep.subr.mxu0 0.0
    %290 = vmatpush2.msra.mxu0 0.0
    %291 = vmatprep.subr.mxu0 0.0
    %292 = vmatpush2.msra.mxu0 0.0
    %293 = vmatprep.subr.mxu0 0.0
    %294 = vmatpush2.msra.mxu0 0.0
    %295 = vmatprep.subr.mxu0 0.0
    %296 = vmatpush2.msra.mxu0 0.0
    %297 = vmatprep.subr.mxu0 0.0
    %298 = vmatpush2.msra.mxu0 0.0
    %299 = vmatprep.subr.mxu0 0.0
    %300 = vmatpush2.msra.mxu0 0.0
    %301 = vmatprep.subr.mxu0 0.0
    %302 = vmatpush2.msra.mxu0 0.0
    %303 = vmatprep.subr.mxu0 0.0
    %304 = vmatpush2.msra.mxu0 0.0
    %305 = vmatprep.subr.mxu0 0.0
    %306 = vmatpush2.msra.mxu0 0.0
    %307 = vmatprep.subr.mxu0 0.0
    %308 = vmatpush2.msra.mxu0 0.0
    %309 = vmatprep.subr.mxu0 0.0
    %310 = vmatpush2.msra.mxu0 0.0
    %311 = vmatprep.subr.mxu0 0.0
    %312 = vmatpush2.msra.mxu0 0.0
    %313 = vmatprep.mubr.f32.mxu0 0.0
    %314 = vmatmul.mubr.f32.gmra.mxu0 %v244
    %v315 = vpop.f32.mrf.mxu0
    %v316 = vadd.f32 %v241, %v315
    %v317 = vpop.f32.mrf.mxu0
    %318 = vmatprep.mubr.f32.mxu0 0.0
    %319 = vmatmul.mubr.f32.gmra.mxu0 %v247
    %v320 = vpop.f32.mrf.mxu0
    %v321 = vadd.f32 %v241, %v320
    %v322 = vpop.f32.mrf.mxu0
    %323 = vdwg.mxu0
    %vm324 = vcmask 171008
    %325 = vst.msk [vmem:[#allocation5] sm:$0xff] %vm324, %v316
    %326 = vst.msk [vmem:[#allocation5 + $0x8] sm:$0xff] %vm324, %v321
    // Predicated region
    $region34: #{tpu_custom_call.1} parent=1 // pred_check
      _
    $region35: #{tpu_custom_call.1} parent=1 // pred_check_branch
      %328 = sbr.rel (0) target = $region37
    $region36: #{tpu_custom_call.1} parent=1 // pred_region
      %s330 = ssub.s32 256, 256
      %331 = vsyncadd [#allocation4], %s330
      %s332 = sshll.u32 [#allocation5], 4
      %s333 = int_to_ptr.vmem [resolvable:$true] %s332
      %338 = dma.vmem_to_hbm [thread:$0]  %s333, 256, %s7, [#allocation4], 128, 128, 8
    $region37: #{tpu_custom_call.1} parent=1 // pred_fallthru
      _
    // Predicated region
    $region38: #{tpu_custom_call.1} parent=1 // pred_check
      _
    $region39: #{tpu_custom_call.1} parent=1 // pred_check_branch
      %340 = sbr.rel (0) target = $region41
    $region40: #{tpu_custom_call.1} parent=1 // pred_region
      %341 = dma.done [#allocation4], 256
    $region41: #{tpu_custom_call.1} parent=1 // pred_fallthru
      _
    %342 = vsyncpa [#allocation3], 1
    %343 = vsyncpa [#allocation4], 1

</llo_original>
